<compile_context>
chip_gen: v5e
topology: v5e:2x2
jax: 0.10.0
libtpu: 0.0.40
codegen_flags: <defaults>
</compile_context>

<pallas_src>
import functools

import jax
import jax.numpy as jnp
from jax.experimental import pallas as pl
from jax.experimental.pallas import tpu as pltpu


def _basic_block_kernel(x_ref, m1_ref, m2_ref, sb_ref, out_ref):
    """One grid step processes B images folded into the lane axis.

    x_ref   : (1, H, Kin)      Kin = B*W*Cin, lane-dense image block
    m1_ref  : (3*Kin, Kout)    conv1 banded matrices, vertical taps stacked on K
    m2_ref  : (3*Kout, Kout)   conv2 banded matrices
    sb_ref  : (4, Kout)        [scale1, bias1, scale2, bias2] lane-tiled
    out_ref : (1, H, Kout)
    """
    x = x_ref[0]                                     # (H, Kin) f32
    h = x.shape[0]

    # (H, H) 0/1 row-shift matrices built from 2-D iotas (tiny, no extra DMA).
    row = jax.lax.broadcasted_iota(jnp.int32, (h, h), 0)
    col = jax.lax.broadcasted_iota(jnp.int32, (h, h), 1)
    s_dn = (col + 1 == row).astype(jnp.float32)      # (s_dn @ y)[i] = y[i-1]; row 0   -> 0
    s_up = (col - 1 == row).astype(jnp.float32)      # (s_up @ y)[i] = y[i+1]; row H-1 -> 0

    def conv3x3(inp, m_ref):
        # Row-shifted copies encode the vertical taps + the pad=1 H border.
        x_dn = jnp.dot(s_dn, inp, preferred_element_type=jnp.float32)
        x_up = jnp.dot(s_up, inp, preferred_element_type=jnp.float32)
        slab = jnp.concatenate([x_dn, inp, x_up], axis=1)        # (H, 3*K)
        return jnp.dot(slab.astype(m_ref.dtype), m_ref[...],
                       preferred_element_type=jnp.float32)       # (H, Kout)

    # ---- conv1 + bn1 + relu ----
    out1 = conv3x3(x, m1_ref)
    out1 = jnp.maximum(out1 * sb_ref[0:1, :] + sb_ref[1:2, :], 0.0)

    # ---- conv2 + bn2 + residual + relu ----
    out2 = conv3x3(out1, m2_ref)
    out = jnp.maximum(out2 * sb_ref[2:3, :] + sb_ref[3:4, :] + x, 0.0)

    out_ref[0] = out.astype(out_ref.dtype)


def _conv3x3_to_band_mats(w_hwio, width):
    """Lower a 3x3 HWIO conv weight to (3, W*Cin, W*Cout) banded GEMM weights.

    mats[kh][(j+dw)*Cin + ci, j*Cout + co] = w[kh, dw+1, ci, co] for valid
    0 <= j+dw < W; out-of-range horizontal taps (padding=1 along W) have no
    entry, so the zero border along W is encoded in the band structure.
    """
    mats = []
    for kh in range(3):
        m = None
        for kw in range(3):
            band = jnp.kron(jnp.eye(width, k=1 - kw, dtype=w_hwio.dtype),
                            w_hwio[kh, kw])
            m = band if m is None else m + band
        mats.append(m)
    return jnp.stack(mats)                           # (3, W*Cin, W*Cout)


def _stacked_band_mats(w_hwio, width, batch_block, dot_dtype):
    """(3*B*W*Cin, B*W*Cout): block-diagonal over the B lane-folded images,
    with the three vertical taps stacked along K (tap t pairs with row i+t-1).
    """
    band = _conv3x3_to_band_mats(w_hwio, width)      # (3, W*Cin, W*Cout)
    eye_b = jnp.eye(batch_block, dtype=band.dtype)
    return jnp.concatenate(
        [jnp.kron(eye_b, band[t]) for t in range(3)], axis=0).astype(dot_dtype)


def make_basic_block_params(w1_hwio, w2_hwio, scale1, bias1, scale2, bias2, *,
                            width, batch_block, dot_dtype=jnp.float32):
    """Pure weight preprocessing.  Loop-invariant for inference: call ONCE."""
    m1 = _stacked_band_mats(w1_hwio, width, batch_block, dot_dtype)
    m2 = _stacked_band_mats(w2_hwio, width, batch_block, dot_dtype)
    reps = batch_block * width                       # lane layout is (b, w, c)
    sb = jnp.stack([jnp.tile(scale1.reshape(-1), reps),
                    jnp.tile(bias1.reshape(-1), reps),
                    jnp.tile(scale2.reshape(-1), reps),
                    jnp.tile(bias2.reshape(-1), reps)]).astype(jnp.float32)
    return m1, m2, sb


def pick_batch_block(batch, width, channels, lane_target=128):
    """Smallest divisor of `batch` whose folded lane width reaches 128 lanes.
    Keeps a batch-parallel grid axis whenever a single image is already
    lane-dense (matters on 2-TensorCore v7x)."""
    best = 1
    for b in range(1, batch + 1):
        if batch % b == 0:
            best = b
            if b * width * channels >= lane_target:
                break
    return best


@functools.partial(jax.jit, static_argnames=("batch_block",))
def basic_block_pallas(x_nhwc, m1, m2, sb, *, batch_block):
    """x_nhwc: (N, H, W, C) f32.  Returns (N, H, W, C) f32."""
    n, h, w, cin = x_nhwc.shape
    b = batch_block
    kin = b * w * cin
    kout = sb.shape[-1]
    cout = kout // (b * w)
    assert n % b == 0, "batch must be divisible by the lane batch block"
    assert cin == cout, "identity residual requires in_channels == out_channels"
    assert m1.shape == (3 * kin, kout) and m2.shape == (3 * kout, kout)
    nb = n // b

    # Layout plumbing only: fold B images into the lane axis -> (NB, H, B*W*C).
    x2d = (x_nhwc.reshape(nb, b, h, w * cin)
           .transpose(0, 2, 1, 3).reshape(nb, h, kin))

    grid_spec = pltpu.PrefetchScalarGridSpec(
        num_scalar_prefetch=0,
        grid=(nb,),
        in_specs=[
            pl.BlockSpec((1, h, kin), lambda i: (i, 0, 0)),
            pl.BlockSpec((3 * kin, kout), lambda i: (0, 0)),
            pl.BlockSpec((3 * kout, kout), lambda i: (0, 0)),
            pl.BlockSpec((4, kout), lambda i: (0, 0)),
        ],
        out_specs=pl.BlockSpec((1, h, kout), lambda i: (i, 0, 0)),
    )

    # CostEstimate reflects the dense dot FLOPs actually issued on the MXU
    # (the banded matrices are only ~3/W dense, so this is deliberately larger
    # than the nominal 9*Cin*Cout conv FLOP count).
    itemsize = jnp.dtype(m1.dtype).itemsize
    cost = pl.CostEstimate(
        flops=nb * (2 * h * (3 * kin) * kout        # conv1 fused dot
                    + 2 * h * (3 * kout) * kout     # conv2 fused dot
                    + 2 * 2 * h * h * kin           # conv1 row-shift dots
                    + 2 * 2 * h * h * kout),        # conv2 row-shift dots
        transcendentals=0,
        bytes_accessed=4 * (x2d.size + nb * h * kout + sb.size)
        + (m1.size + m2.size) * itemsize,
    )

    out2d = pl.pallas_call(
        _basic_block_kernel,
        out_shape=jax.ShapeDtypeStruct((nb, h, kout), jnp.float32),
        grid_spec=grid_spec,
        compiler_params=pltpu.CompilerParams(
            dimension_semantics=("parallel",)),
        cost_estimate=cost,
    )(x2d, m1, m2, sb)

    # Unfold the lane-batched layout back to NHWC (cheap layout op).
    return (out2d.reshape(nb, h, b, w, cout)
            .transpose(0, 2, 1, 3, 4).reshape(n, h, w, cout))


def _reference(x_nhwc, w1_hwio, w2_hwio, scale1, bias1, scale2, bias2):
    """Pure-JAX reference of the same forward pass (for verification)."""
    dn = ("NHWC", "HWIO", "NHWC")
    out = jax.lax.conv_general_dilated(x_nhwc, w1_hwio, (1, 1), "SAME",
                                       dimension_numbers=dn)
    out = jnp.maximum(out * scale1[0] + bias1[0], 0.0)
    out = jax.lax.conv_general_dilated(out, w2_hwio, (1, 1), "SAME",
                                       dimension_numbers=dn)
    out = out * scale2[0] + bias2[0] + x_nhwc
    return jnp.maximum(out, 0.0)


if __name__ == "__main__":
    # Small shapes consistent with the module: batch=2, channels=4, spatial=16.
    N, C, H, W = 2, 4, 16, 16
    EPS = 1e-5

    key = jax.random.PRNGKey(0)
    keys = jax.random.split(key, 9)

    # PyTorch-style input (NCHW) and conv weights (OIHW), built deterministically.
    x_nchw = jax.random.normal(keys[0], (N, C, H, W), jnp.float32)
    w1_oihw = 0.1 * jax.random.normal(keys[1], (C, C, 3, 3), jnp.float32)
    w2_oihw = 0.1 * jax.random.normal(keys[2], (C, C, 3, 3), jnp.float32)

    # BatchNorm parameters / running stats, folded into scale & bias (eval mode).
    gamma1 = 1.0 + 0.1 * jax.random.normal(keys[3], (C,), jnp.float32)
    beta1 = 0.1 * jax.random.normal(keys[4], (C,), jnp.float32)
    mean1 = 0.1 * jax.random.normal(keys[5], (C,), jnp.float32)
    var1 = 1.0 + 0.5 * jax.random.uniform(keys[6], (C,), jnp.float32)
    gamma2 = 1.0 + 0.1 * jax.random.normal(keys[7], (C,), jnp.float32)
    beta2 = 0.1 * jax.random.normal(keys[8], (C,), jnp.float32)
    mean2 = jnp.zeros((C,), jnp.float32)
    var2 = jnp.ones((C,), jnp.float32)

    scale1 = (gamma1 / jnp.sqrt(var1 + EPS)).reshape(1, C)
    bias1 = (beta1 - mean1 * gamma1 / jnp.sqrt(var1 + EPS)).reshape(1, C)
    scale2 = (gamma2 / jnp.sqrt(var2 + EPS)).reshape(1, C)
    bias2 = (beta2 - mean2 * gamma2 / jnp.sqrt(var2 + EPS)).reshape(1, C)

    # Convert layouts: NCHW -> NHWC, OIHW -> HWIO.
    x_nhwc = jnp.transpose(x_nchw, (0, 2, 3, 1))
    w1_hwio = jnp.transpose(w1_oihw, (2, 3, 1, 0))
    w2_hwio = jnp.transpose(w2_oihw, (2, 3, 1, 0))

    # One-time weight preprocessing, hoisted out of the per-call path.
    batch_block = pick_batch_block(N, W, C)          # -> 2 (lane width 128)
    m1, m2, sb = make_basic_block_params(
        w1_hwio, w2_hwio, scale1, bias1, scale2, bias2,
        width=W, batch_block=batch_block)
    m1, m2, sb = jax.block_until_ready((m1, m2, sb))

    out = basic_block_pallas(x_nhwc, m1, m2, sb, batch_block=batch_block)
    out = jax.block_until_ready(out)

    ref = _reference(x_nhwc, w1_hwio, w2_hwio, scale1, bias1, scale2, bias2)
    assert jnp.allclose(out, ref, atol=1e-4, rtol=1e-4), (
        f"max abs err {jnp.max(jnp.abs(out - ref))}")

    print("KERNEL_OK")
</pallas_src>

<mosaic_0001>
module attributes {stable_mosaic.version = 11 : i64} {
  func.func @_basic_block_kernel(%arg0: i32, %arg1: memref<1x16x128xf32, #tpu.memory_space<vmem>>, %arg2: memref<384x128xf32, #tpu.memory_space<vmem>>, %arg3: memref<384x128xf32, #tpu.memory_space<vmem>>, %arg4: memref<4x128xf32, #tpu.memory_space<vmem>>, %arg5: memref<1x16x128xf32, #tpu.memory_space<vmem>>) attributes {dimension_semantics = [#tpu.dimension_semantics<parallel>], iteration_bounds = array<i64: 1>, scalar_prefetch = 0 : i64, scratch_operands = 0 : i64, tpu.core_type = #tpu.core_type<tc>, window_params = [{transform_indices = @transform_0, window_bounds = array<i64: 1, 16, 128>}, {pipeline_mode = #tpu.pipeline_mode<synchronous>, transform_indices = @transform_1, window_bounds = array<i64: 384, 128>}, {pipeline_mode = #tpu.pipeline_mode<synchronous>, transform_indices = @transform_2, window_bounds = array<i64: 384, 128>}, {pipeline_mode = #tpu.pipeline_mode<synchronous>, transform_indices = @transform_3, window_bounds = array<i64: 4, 128>}, {transform_indices = @transform_4, window_bounds = array<i64: 1, 16, 128>}]} {
    %c0 = arith.constant 0 : index
    %c0_0 = arith.constant 0 : index
    %c0_1 = arith.constant 0 : index
    %0 = vector.load %arg1[%c0, %c0_0, %c0_1] : memref<1x16x128xf32, #tpu.memory_space<vmem>>, vector<1x16x128xf32>
    %1 = vector.shape_cast %0 : vector<1x16x128xf32> to vector<16x128xf32>
    %2 = tpu.iota {dimensions = array<i32: 0>} : vector<16x16xi32>
    %3 = tpu.iota {dimensions = array<i32: 1>} : vector<16x16xi32>
    %c1_i32 = arith.constant 1 : i32
    %4 = vector.broadcast %c1_i32 : i32 to vector<16x16xi32>
    %5 = arith.addi %3, %4 : vector<16x16xi32>
    %6 = arith.cmpi eq, %5, %2 : vector<16x16xi32>
    %7 = arith.extui %6 : vector<16x16xi1> to vector<16x16xi32>
    %8 = arith.sitofp %7 : vector<16x16xi32> to vector<16x16xf32>
    %c1_i32_2 = arith.constant 1 : i32
    %9 = vector.broadcast %c1_i32_2 : i32 to vector<16x16xi32>
    %10 = arith.subi %3, %9 : vector<16x16xi32>
    %11 = arith.cmpi eq, %10, %2 : vector<16x16xi32>
    %12 = arith.extui %11 : vector<16x16xi1> to vector<16x16xi32>
    %13 = arith.sitofp %12 : vector<16x16xi32> to vector<16x16xf32>
    %cst = arith.constant dense<0.000000e+00> : vector<16x128xf32>
    %14 = tpu.matmul %8, %1, %cst {dimension_numbers = #tpu.dot_dimension_numbers<[1], [0], [0], [1], [0, 0, 1, 1], [], []>} : vector<16x16xf32>, vector<16x128xf32>, vector<16x128xf32> -> vector<16x128xf32>
    %cst_3 = arith.constant dense<0.000000e+00> : vector<16x128xf32>
    %15 = tpu.matmul %13, %1, %cst_3 {dimension_numbers = #tpu.dot_dimension_numbers<[1], [0], [0], [1], [0, 0, 1, 1], [], []>} : vector<16x16xf32>, vector<16x128xf32>, vector<16x128xf32> -> vector<16x128xf32>
    %16 = tpu.concatenate %14, %1, %15 in 1 : vector<16x128xf32>, vector<16x128xf32>, vector<16x128xf32> -> vector<16x384xf32>
    %c0_4 = arith.constant 0 : index
    %c0_5 = arith.constant 0 : index
    %17 = vector.load %arg2[%c0_4, %c0_5] : memref<384x128xf32, #tpu.memory_space<vmem>>, vector<384x128xf32>
    %cst_6 = arith.constant dense<0.000000e+00> : vector<16x128xf32>
    %18 = tpu.matmul %16, %17, %cst_6 {dimension_numbers = #tpu.dot_dimension_numbers<[1], [0], [0], [1], [0, 0, 1, 1], [], []>} : vector<16x384xf32>, vector<384x128xf32>, vector<16x128xf32> -> vector<16x128xf32>
    %c0_7 = arith.constant 0 : index
    %c0_8 = arith.constant 0 : index
    %19 = vector.load %arg4[%c0_7, %c0_8] : memref<4x128xf32, #tpu.memory_space<vmem>>, vector<1x128xf32>
    %20 = vector.broadcast %19 : vector<1x128xf32> to vector<16x128xf32>
    %21 = arith.mulf %18, %20 : vector<16x128xf32>
    %c1 = arith.constant 1 : index
    %c0_9 = arith.constant 0 : index
    %22 = vector.load %arg4[%c1, %c0_9] : memref<4x128xf32, #tpu.memory_space<vmem>>, vector<1x128xf32>
    %23 = vector.broadcast %22 : vector<1x128xf32> to vector<16x128xf32>
    %24 = arith.addf %21, %23 : vector<16x128xf32>
    %cst_10 = arith.constant 0.000000e+00 : f32
    %25 = vector.broadcast %cst_10 : f32 to vector<16x128xf32>
    %26 = arith.maximumf %24, %25 : vector<16x128xf32>
    %cst_11 = arith.constant dense<0.000000e+00> : vector<16x128xf32>
    %27 = tpu.matmul %8, %26, %cst_11 {dimension_numbers = #tpu.dot_dimension_numbers<[1], [0], [0], [1], [0, 0, 1, 1], [], []>} : vector<16x16xf32>, vector<16x128xf32>, vector<16x128xf32> -> vector<16x128xf32>
    %cst_12 = arith.constant dense<0.000000e+00> : vector<16x128xf32>
    %28 = tpu.matmul %13, %26, %cst_12 {dimension_numbers = #tpu.dot_dimension_numbers<[1], [0], [0], [1], [0, 0, 1, 1], [], []>} : vector<16x16xf32>, vector<16x128xf32>, vector<16x128xf32> -> vector<16x128xf32>
    %29 = tpu.concatenate %27, %26, %28 in 1 : vector<16x128xf32>, vector<16x128xf32>, vector<16x128xf32> -> vector<16x384xf32>
    %c0_13 = arith.constant 0 : index
    %c0_14 = arith.constant 0 : index
    %30 = vector.load %arg3[%c0_13, %c0_14] : memref<384x128xf32, #tpu.memory_space<vmem>>, vector<384x128xf32>
    %cst_15 = arith.constant dense<0.000000e+00> : vector<16x128xf32>
    %31 = tpu.matmul %29, %30, %cst_15 {dimension_numbers = #tpu.dot_dimension_numbers<[1], [0], [0], [1], [0, 0, 1, 1], [], []>} : vector<16x384xf32>, vector<384x128xf32>, vector<16x128xf32> -> vector<16x128xf32>
    %c2 = arith.constant 2 : index
    %c0_16 = arith.constant 0 : index
    %32 = vector.load %arg4[%c2, %c0_16] : memref<4x128xf32, #tpu.memory_space<vmem>>, vector<1x128xf32>
    %33 = vector.broadcast %32 : vector<1x128xf32> to vector<16x128xf32>
    %34 = arith.mulf %31, %33 : vector<16x128xf32>
    %c3 = arith.constant 3 : index
    %c0_17 = arith.constant 0 : index
    %35 = vector.load %arg4[%c3, %c0_17] : memref<4x128xf32, #tpu.memory_space<vmem>>, vector<1x128xf32>
    %36 = vector.broadcast %35 : vector<1x128xf32> to vector<16x128xf32>
    %37 = arith.addf %34, %36 : vector<16x128xf32>
    %38 = arith.addf %37, %1 : vector<16x128xf32>
    %cst_18 = arith.constant 0.000000e+00 : f32
    %39 = vector.broadcast %cst_18 : f32 to vector<16x128xf32>
    %40 = arith.maximumf %38, %39 : vector<16x128xf32>
    %c0_19 = arith.constant 0 : index
    %c0_20 = arith.constant 0 : index
    %c0_21 = arith.constant 0 : index
    %41 = vector.load %arg5[%c0_19, %c0_20, %c0_21] : memref<1x16x128xf32, #tpu.memory_space<vmem>>, vector<1x16x128xf32>
    %42 = vector.shape_cast %41 : vector<1x16x128xf32> to vector<16x128xf32>
    %43 = vector.shape_cast %40 : vector<16x128xf32> to vector<1x16x128xf32>
    tpu.vector_store %arg5[%c0_19, %c0_20, %c0_21], %43 {strides = array<i32>} : memref<1x16x128xf32, #tpu.memory_space<vmem>>, vector<1x16x128xf32>,
    return
  }
  func.func @transform_0(%arg0: i32) -> (i32, i32, i32) {
    %c0_i32 = arith.constant 0 : i32
    %c0_i32_0 = arith.constant 0 : i32
    %c0_i32_1 = arith.constant 0 : i32
    return %arg0, %c0_i32, %c0_i32_0 : i32, i32, i32
  }
  func.func @transform_1(%arg0: i32) -> (i32, i32) {
    %c0_i32 = arith.constant 0 : i32
    %c0_i32_0 = arith.constant 0 : i32
    %c0_i32_1 = arith.constant 0 : i32
    return %c0_i32, %c0_i32_0 : i32, i32
  }
  func.func @transform_2(%arg0: i32) -> (i32, i32) {
    %c0_i32 = arith.constant 0 : i32
    %c0_i32_0 = arith.constant 0 : i32
    %c0_i32_1 = arith.constant 0 : i32
    return %c0_i32, %c0_i32_0 : i32, i32
  }
  func.func @transform_3(%arg0: i32) -> (i32, i32) {
    %c0_i32 = arith.constant 0 : i32
    %c0_i32_0 = arith.constant 0 : i32
    %c0_i32_1 = arith.constant 0 : i32
    return %c0_i32, %c0_i32_0 : i32, i32
  }
  func.func @transform_4(%arg0: i32) -> (i32, i32, i32) {
    %c0_i32 = arith.constant 0 : i32
    %c0_i32_0 = arith.constant 0 : i32
    %c0_i32_1 = arith.constant 0 : i32
    return %arg0, %c0_i32, %c0_i32_0 : i32, i32, i32
  }
}

</mosaic_0001>

<llo_original>
// kernel: basic_block_pallas.1
$region0: #{basic_block_pallas.1}
  #allocation0 [shape = 'u32[]', space=smem, size = 0x4, offset = 0x4, fixed_abs, tag = 'smem constant byte address 0x4 - core index']
  #allocation1 [shape = 'u32[72,128]{1,0:T(1,128)}', space=vmem, size = 0x9000, scoped, tag = 'internal scratch']
  %s0 = inlined_call_operand.vmem [shape: f32[1,16,128], index: 0, kind: input, shape index: {}]
  %s1 = inlined_call_operand.vmem [shape: f32[384,128], index: 1, kind: input, shape index: {}]
  %s2 = inlined_call_operand.hbm [shape: f32[384,128], index: 2, kind: input, shape index: {}]
  %s3 = inlined_call_operand.vmem [shape: f32[4,128], index: 3, kind: input, shape index: {}]
  %s4 = inlined_call_operand.vmem [shape: f32[1,16,128], index: 4, kind: output, shape index: {}]
  %s5 = sld [smem:[#allocation0]]
  $region30: #{basic_block_pallas.1} parent=0
    _
  %s7 = ssub.s32 1, %s5
  %s8 = scalar_select 0, %s7, %s5
  $region1: #{basic_block_pallas.1} parent=0
    #allocation2 [shape = 'u8[196608]{0}', space=vmem, size = 0x30000, scoped, tag = 'input window, operand 2, single buffered']
    #allocation3 [shape = 's32[1]{0}', space=sflag, size = 0x4, scoped, tag = 'scoped memory for basic_block_pallas.1']
    %9 = vsyncpa [#allocation3], 0
    // Predicated region
    $region2: #{basic_block_pallas.1} parent=1 // pred_check
      _
    $region3: #{basic_block_pallas.1} parent=1 // pred_check_branch
      %11 = sbr.rel (0) target = $region5
    $region4: #{basic_block_pallas.1} parent=1 // pred_region
      _
    $region5: #{basic_block_pallas.1} parent=1 // pred_fallthru
      _
    // Predicated region
    $region6: #{basic_block_pallas.1} parent=1 // pred_check
      _
    $region7: #{basic_block_pallas.1} parent=1 // pred_check_branch
      %13 = sbr.rel (0) target = $region9
    $region8: #{basic_block_pallas.1} parent=1 // pred_region
      _
    $region9: #{basic_block_pallas.1} parent=1 // pred_fallthru
      _
    // Predicated region
    $region10: #{basic_block_pallas.1} parent=1 // pred_check
      _
    $region11: #{basic_block_pallas.1} parent=1 // pred_check_branch
      %15 = sbr.rel (0) target = $region13
    $region12: #{basic_block_pallas.1} parent=1 // pred_region
      %17 = vsyncadd [#allocation3], 0
      %s18 = sshll.u32 %s2, 4
      %s19 = int_to_ptr.hbm [resolvable:$true] %s18
      %s20 = sshll.u32 [#allocation2], 4
      %s21 = int_to_ptr.vmem [resolvable:$true] %s20
      %26 = dma.hbm_to_vmem [thread:$0]  %s19, 6144, %s21, [#allocation3], 128, 128, 8
    $region13: #{basic_block_pallas.1} parent=1 // pred_fallthru
      _
    // Predicated region
    $region14: #{basic_block_pallas.1} parent=1 // pred_check
      _
    $region15: #{basic_block_pallas.1} parent=1 // pred_check_branch
      %28 = sbr.rel (0) target = $region17
    $region16: #{basic_block_pallas.1} parent=1 // pred_region
      _
    $region17: #{basic_block_pallas.1} parent=1 // pred_fallthru
      _
    // Predicated region
    $region18: #{basic_block_pallas.1} parent=1 // pred_check
      _
    $region19: #{basic_block_pallas.1} parent=1 // pred_check_branch
      %30 = sbr.rel (0) target = $region21
    $region20: #{basic_block_pallas.1} parent=1 // pred_region
      %32 = dma.done [#allocation3], 6144
    $region21: #{basic_block_pallas.1} parent=1 // pred_fallthru
      _
    %v33 = vld [vmem:[%s0] sm:$0xff]
    %v34 = vld [vmem:[%s0 + $0x8] sm:$0xff]
    %v35 = vlaneseq
    %v36 = vshrl.u32 %v35, 7
    %v37 = vadd.s32 %v36, 8
    %v38 = vlaneseq
    %v39 = vand.u32 %v38, 127
    %v40 = vadd.s32 %v39, 1
    %vm41 = vcmp.eq.s32.totalorder %v40, %v36
    %vm42 = vcmp.eq.s32.totalorder %v40, %v37
    %v43 = vsel %vm41, 1, 0
    %v44 = vsel %vm42, 1, 0
    %v45 = vcvt.s32.f32 %v43
    %v46 = vcvt.s32.f32 %v44
    %v47 = vsub.s32 %v39, 1
    %vm48 = vcmp.eq.s32.totalorder %v47, %v36
    %vm49 = vcmp.eq.s32.totalorder %v47, %v37
    %v50 = vsel %vm48, 1, 0
    %v51 = vsel %vm49, 1, 0
    %v52 = vcvt.s32.f32 %v50
    %v53 = vcvt.s32.f32 %v51
    %vm54 = vcmask 130048
    %v56 = vsel %vm54, %v45, 0
    %v59 = vsel %vm54, %v46, 0
    %61 = vmatpush.msra.mxu0 0.0
    %62 = vmatpush.msra.mxu0 0.0
    %63 = vmatpush.msra.mxu0 0.0
    %64 = vmatpush.msra.mxu0 0.0
    %65 = vmatpush.msra.mxu0 0.0
    %66 = vmatpush.msra.mxu0 0.0
    %67 = vmatpush.msra.mxu0 0.0
    %68 = vmatpush.msra.mxu0 0.0
    %69 = vmatpush.msra.mxu0 0.0
    %70 = vmatpush.msra.mxu0 0.0
    %71 = vmatpush.msra.mxu0 0.0
    %72 = vmatpush.msra.mxu0 0.0
    %73 = vmatpush.msra.mxu0 0.0
    %74 = vmatpush.msra.mxu0 0.0
    %75 = vmatpush.msra.mxu0 %v34
    %76 = vmatpush.msra.mxu0 %v33
    %77 = vmatmul.f32.gmra.mxu0 %v56
    %v78 = vpop.f32.mrf.mxu0
    %v79 = vadd.f32 0.0, %v78
    %80 = vmatmul.f32.gmra.mxu0 %v59
    %v81 = vpop.f32.mrf.mxu0
    %v82 = vadd.f32 0.0, %v81
    %83 = vdwg.mxu0
    %v85 = vsel %vm54, %v52, 0
    %v88 = vsel %vm54, %v53, 0
    %90 = vmatpush.msra.mxu0 0.0
    %91 = vmatpush.msra.mxu0 0.0
    %92 = vmatpush.msra.mxu0 0.0
    %93 = vmatpush.msra.mxu0 0.0
    %94 = vmatpush.msra.mxu0 0.0
    %95 = vmatpush.msra.mxu0 0.0
    %96 = vmatpush.msra.mxu0 0.0
    %97 = vmatpush.msra.mxu0 0.0
    %98 = vmatpush.msra.mxu0 0.0
    %99 = vmatpush.msra.mxu0 0.0
    %100 = vmatpush.msra.mxu0 0.0
    %101 = vmatpush.msra.mxu0 0.0
    %102 = vmatpush.msra.mxu0 0.0
    %103 = vmatpush.msra.mxu0 0.0
    %104 = vmatpush.msra.mxu0 %v34
    %105 = vmatpush.msra.mxu0 %v33
    %106 = vmatmul.f32.gmra.mxu0 %v85
    %v107 = vpop.f32.mrf.mxu0
    %v108 = vadd.f32 0.0, %v107
    %109 = vmatmul.f32.gmra.mxu0 %v88
    %v110 = vpop.f32.mrf.mxu0
    %v111 = vadd.f32 0.0, %v110
    %112 = vdwg.mxu0
    %v113 = vld [vmem:[%s1] sm:$0xff]
    %v114 = vld [vmem:[%s1 + $0x8] sm:$0xff]
    %v115 = vld [vmem:[%s1 + $0x10] sm:$0xff]
    %v116 = vld [vmem:[%s1 + $0x18] sm:$0xff]
    %v117 = vld [vmem:[%s1 + $0x20] sm:$0xff]
    %v118 = vld [vmem:[%s1 + $0x28] sm:$0xff]
    %v119 = vld [vmem:[%s1 + $0x30] sm:$0xff]
    %v120 = vld [vmem:[%s1 + $0x38] sm:$0xff]
    %v121 = vld [vmem:[%s1 + $0x40] sm:$0xff]
    %v122 = vld [vmem:[%s1 + $0x48] sm:$0xff]
    %v123 = vld [vmem:[%s1 + $0x50] sm:$0xff]
    %v124 = vld [vmem:[%s1 + $0x58] sm:$0xff]
    %v125 = vld [vmem:[%s1 + $0x60] sm:$0xff]
    %v126 = vld [vmem:[%s1 + $0x68] sm:$0xff]
    %v127 = vld [vmem:[%s1 + $0x70] sm:$0xff]
    %v128 = vld [vmem:[%s1 + $0x78] sm:$0xff]
    %v129 = vld [vmem:[%s1 + $0x80] sm:$0xff]
    %v130 = vld [vmem:[%s1 + $0x88] sm:$0xff]
    %v131 = vld [vmem:[%s1 + $0x90] sm:$0xff]
    %v132 = vld [vmem:[%s1 + $0x98] sm:$0xff]
    %v133 = vld [vmem:[%s1 + $0xa0] sm:$0xff]
    %v134 = vld [vmem:[%s1 + $0xa8] sm:$0xff]
    %v135 = vld [vmem:[%s1 + $0xb0] sm:$0xff]
    %v136 = vld [vmem:[%s1 + $0xb8] sm:$0xff]
    %v137 = vld [vmem:[%s1 + $0xc0] sm:$0xff]
    %v138 = vld [vmem:[%s1 + $0xc8] sm:$0xff]
    %v139 = vld [vmem:[%s1 + $0xd0] sm:$0xff]
    %v140 = vld [vmem:[%s1 + $0xd8] sm:$0xff]
    %v141 = vld [vmem:[%s1 + $0xe0] sm:$0xff]
    %v142 = vld [vmem:[%s1 + $0xe8] sm:$0xff]
    %v143 = vld [vmem:[%s1 + $0xf0] sm:$0xff]
    %v144 = vld [vmem:[%s1 + $0xf8] sm:$0xff]
    %v145 = vld [vmem:[%s1 + $0x100] sm:$0xff]
    %v146 = vld [vmem:[%s1 + $0x108] sm:$0xff]
    %v147 = vld [vmem:[%s1 + $0x110] sm:$0xff]
    %v148 = vld [vmem:[%s1 + $0x118] sm:$0xff]
    %v149 = vld [vmem:[%s1 + $0x120] sm:$0xff]
    %v150 = vld [vmem:[%s1 + $0x128] sm:$0xff]
    %v151 = vld [vmem:[%s1 + $0x130] sm:$0xff]
    %v152 = vld [vmem:[%s1 + $0x138] sm:$0xff]
    %v153 = vld [vmem:[%s1 + $0x140] sm:$0xff]
    %v154 = vld [vmem:[%s1 + $0x148] sm:$0xff]
    %v155 = vld [vmem:[%s1 + $0x150] sm:$0xff]
    %v156 = vld [vmem:[%s1 + $0x158] sm:$0xff]
    %v157 = vld [vmem:[%s1 + $0x160] sm:$0xff]
    %v158 = vld [vmem:[%s1 + $0x168] sm:$0xff]
    %v159 = vld [vmem:[%s1 + $0x170] sm:$0xff]
    %v160 = vld [vmem:[%s1 + $0x178] sm:$0xff]
    %161 = vmatpush.msra.mxu0 %v128
    %162 = vmatpush.msra.mxu0 %v127
    %163 = vmatpush.msra.mxu0 %v126
    %164 = vmatpush.msra.mxu0 %v125
    %165 = vmatpush.msra.mxu0 %v124
    %166 = vmatpush.msra.mxu0 %v123
    %167 = vmatpush.msra.mxu0 %v122
    %168 = vmatpush.msra.mxu0 %v121
    %169 = vmatpush.msra.mxu0 %v120
    %170 = vmatpush.msra.mxu0 %v119
    %171 = vmatpush.msra.mxu0 %v118
    %172 = vmatpush.msra.mxu0 %v117
    %173 = vmatpush.msra.mxu0 %v116
    %174 = vmatpush.msra.mxu0 %v115
    %175 = vmatpush.msra.mxu0 %v114
    %176 = vmatpush.msra.mxu0 %v113
    %177 = vmatmul.f32.gmra.mxu0 %v79
    %v178 = vpop.f32.mrf.mxu0
    %v179 = vadd.f32 0.0, %v178
    %180 = vmatmul.f32.gmra.mxu0 %v82
    %v181 = vpop.f32.mrf.mxu0
    %v182 = vadd.f32 0.0, %v181
    %183 = vdwg.mxu0
    %184 = vmatpush.msra.mxu0 %v144
    %185 = vmatpush.msra.mxu0 %v143
    %186 = vmatpush.msra.mxu0 %v142
    %187 = vmatpush.msra.mxu0 %v141
    %188 = vmatpush.msra.mxu0 %v140
    %189 = vmatpush.msra.mxu0 %v139
    %190 = vmatpush.msra.mxu0 %v138
    %191 = vmatpush.msra.mxu0 %v137
    %192 = vmatpush.msra.mxu0 %v136
    %193 = vmatpush.msra.mxu0 %v135
    %194 = vmatpush.msra.mxu0 %v134
    %195 = vmatpush.msra.mxu0 %v133
    %196 = vmatpush.msra.mxu0 %v132
    %197 = vmatpush.msra.mxu0 %v131
    %198 = vmatpush.msra.mxu0 %v130
    %199 = vmatpush.msra.mxu0 %v129
    %200 = vmatmul.f32.gmra.mxu0 %v33
    %v201 = vpop.f32.mrf.mxu0
    %v202 = vadd.f32 %v179, %v201
    %203 = vmatmul.f32.gmra.mxu0 %v34
    %v204 = vpop.f32.mrf.mxu0
    %v205 = vadd.f32 %v182, %v204
    %206 = vdwg.mxu0
    %207 = vmatpush.msra.mxu0 %v160
    %208 = vmatpush.msra.mxu0 %v159
    %209 = vmatpush.msra.mxu0 %v158
    %210 = vmatpush.msra.mxu0 %v157
    %211 = vmatpush.msra.mxu0 %v156
    %212 = vmatpush.msra.mxu0 %v155
    %213 = vmatpush.msra.mxu0 %v154
    %214 = vmatpush.msra.mxu0 %v153
    %215 = vmatpush.msra.mxu0 %v152
    %216 = vmatpush.msra.mxu0 %v151
    %217 = vmatpush.msra.mxu0 %v150
    %218 = vmatpush.msra.mxu0 %v149
    %219 = vmatpush.msra.mxu0 %v148
    %220 = vmatpush.msra.mxu0 %v147
    %221 = vmatpush.msra.mxu0 %v146
    %222 = vmatpush.msra.mxu0 %v145
    %223 = vmatmul.f32.gmra.mxu0 %v108
    %v224 = vpop.f32.mrf.mxu0
    %v225 = vadd.f32 %v202, %v224
    %226 = vmatmul.f32.gmra.mxu0 %v111
    %v227 = vpop.f32.mrf.mxu0
    %v228 = vadd.f32 %v205, %v227
    %229 = vdwg.mxu0
    %v230 = vld [vmem:[%s3] sm:$0x1]
    %v231 = vperm.slane %v230, 0
    %v232 = vmul.f32 %v225, %v231
    %v233 = vmul.f32 %v228, %v231
    %v234 = vld [vmem:[%s3 + $0x1] sm:$0x1]
    %v235 = vperm.slane %v234, 0
    %v236 = vadd.f32 %v232, %v235
    %v237 = vadd.f32 %v233, %v235
    %v238 = vmax.f32 %v236, 0.0
    %v239 = vmax.f32 %v237, 0.0
    %240 = vmatpush.msra.mxu0 0.0
    %241 = vmatpush.msra.mxu0 0.0
    %242 = vmatpush.msra.mxu0 0.0
    %243 = vmatpush.msra.mxu0 0.0
    %244 = vmatpush.msra.mxu0 0.0
    %245 = vmatpush.msra.mxu0 0.0
    %246 = vmatpush.msra.mxu0 0.0
    %247 = vmatpush.msra.mxu0 0.0
    %248 = vmatpush.msra.mxu0 0.0
    %249 = vmatpush.msra.mxu0 0.0
    %250 = vmatpush.msra.mxu0 0.0
    %251 = vmatpush.msra.mxu0 0.0
    %252 = vmatpush.msra.mxu0 0.0
    %253 = vmatpush.msra.mxu0 0.0
    %254 = vmatpush.msra.mxu0 %v239
    %255 = vmatpush.msra.mxu0 %v238
    %256 = vmatmul.f32.gmra.mxu0 %v56
    %v257 = vpop.f32.mrf.mxu0
    %v258 = vadd.f32 0.0, %v257
    %259 = vmatmul.f32.gmra.mxu0 %v59
    %v260 = vpop.f32.mrf.mxu0
    %v261 = vadd.f32 0.0, %v260
    %262 = vdwg.mxu0
    %263 = vmatpush.msra.mxu0 0.0
    %264 = vmatpush.msra.mxu0 0.0
    %265 = vmatpush.msra.mxu0 0.0
    %266 = vmatpush.msra.mxu0 0.0
    %267 = vmatpush.msra.mxu0 0.0
    %268 = vmatpush.msra.mxu0 0.0
    %269 = vmatpush.msra.mxu0 0.0
    %270 = vmatpush.msra.mxu0 0.0
    %271 = vmatpush.msra.mxu0 0.0
    %272 = vmatpush.msra.mxu0 0.0
    %273 = vmatpush.msra.mxu0 0.0
    %274 = vmatpush.msra.mxu0 0.0
    %275 = vmatpush.msra.mxu0 0.0
    %276 = vmatpush.msra.mxu0 0.0
    %277 = vmatpush.msra.mxu0 %v239
    %278 = vmatpush.msra.mxu0 %v238
    %279 = vmatmul.f32.gmra.mxu0 %v85
    %v280 = vpop.f32.mrf.mxu0
    %v281 = vadd.f32 0.0, %v280
    %282 = vmatmul.f32.gmra.mxu0 %v88
    %v283 = vpop.f32.mrf.mxu0
    %v284 = vadd.f32 0.0, %v283
    %285 = vdwg.mxu0
    %v286 = vld [vmem:[#allocation2] sm:$0xff]
    %v287 = vld [vmem:[#allocation2 + $0x8] sm:$0xff]
    %v288 = vld [vmem:[#allocation2 + $0x10] sm:$0xff]
    %v289 = vld [vmem:[#allocation2 + $0x18] sm:$0xff]
    %v290 = vld [vmem:[#allocation2 + $0x20] sm:$0xff]
    %v291 = vld [vmem:[#allocation2 + $0x28] sm:$0xff]
    %v292 = vld [vmem:[#allocation2 + $0x30] sm:$0xff]
    %v293 = vld [vmem:[#allocation2 + $0x38] sm:$0xff]
    %v294 = vld [vmem:[#allocation2 + $0x40] sm:$0xff]
    %v295 = vld [vmem:[#allocation2 + $0x48] sm:$0xff]
    %v296 = vld [vmem:[#allocation2 + $0x50] sm:$0xff]
    %v297 = vld [vmem:[#allocation2 + $0x58] sm:$0xff]
    %v298 = vld [vmem:[#allocation2 + $0x60] sm:$0xff]
    %v299 = vld [vmem:[#allocation2 + $0x68] sm:$0xff]
    %v300 = vld [vmem:[#allocation2 + $0x70] sm:$0xff]
    %v301 = vld [vmem:[#allocation2 + $0x78] sm:$0xff]
    %v302 = vld [vmem:[#allocation2 + $0x80] sm:$0xff]
    %v303 = vld [vmem:[#allocation2 + $0x88] sm:$0xff]
    %v304 = vld [vmem:[#allocation2 + $0x90] sm:$0xff]
    %v305 = vld [vmem:[#allocation2 + $0x98] sm:$0xff]
    %v306 = vld [vmem:[#allocation2 + $0xa0] sm:$0xff]
    %v307 = vld [vmem:[#allocation2 + $0xa8] sm:$0xff]
    %v308 = vld [vmem:[#allocation2 + $0xb0] sm:$0xff]
    %v309 = vld [vmem:[#allocation2 + $0xb8] sm:$0xff]
    %v310 = vld [vmem:[#allocation2 + $0xc0] sm:$0xff]
    %v311 = vld [vmem:[#allocation2 + $0xc8] sm:$0xff]
    %v312 = vld [vmem:[#allocation2 + $0xd0] sm:$0xff]
    %v313 = vld [vmem:[#allocation2 + $0xd8] sm:$0xff]
    %v314 = vld [vmem:[#allocation2 + $0xe0] sm:$0xff]
    %v315 = vld [vmem:[#allocation2 + $0xe8] sm:$0xff]
    %v316 = vld [vmem:[#allocation2 + $0xf0] sm:$0xff]
    %v317 = vld [vmem:[#allocation2 + $0xf8] sm:$0xff]
    %v318 = vld [vmem:[#allocation2 + $0x100] sm:$0xff]
    %v319 = vld [vmem:[#allocation2 + $0x108] sm:$0xff]
    %v320 = vld [vmem:[#allocation2 + $0x110] sm:$0xff]
    %v321 = vld [vmem:[#allocation2 + $0x118] sm:$0xff]
    %v322 = vld [vmem:[#allocation2 + $0x120] sm:$0xff]
    %v323 = vld [vmem:[#allocation2 + $0x128] sm:$0xff]
    %v324 = vld [vmem:[#allocation2 + $0x130] sm:$0xff]
    %v325 = vld [vmem:[#allocation2 + $0x138] sm:$0xff]
    %v326 = vld [vmem:[#allocation2 + $0x140] sm:$0xff]
    %v327 = vld [vmem:[#allocation2 + $0x148] sm:$0xff]
    %v328 = vld [vmem:[#allocation2 + $0x150] sm:$0xff]
    %v329 = vld [vmem:[#allocation2 + $0x158] sm:$0xff]
    %v330 = vld [vmem:[#allocation2 + $0x160] sm:$0xff]
    %v331 = vld [vmem:[#allocation2 + $0x168] sm:$0xff]
    %v332 = vld [vmem:[#allocation2 + $0x170] sm:$0xff]
    %v333 = vld [vmem:[#allocation2 + $0x178] sm:$0xff]
    %334 = vmatpush.msra.mxu0 %v301
    %335 = vmatpush.msra.mxu0 %v300
    %336 = vmatpush.msra.mxu0 %v299
    %337 = vmatpush.msra.mxu0 %v298
    %338 = vmatpush.msra.mxu0 %v297
    %339 = vmatpush.msra.mxu0 %v296
    %340 = vmatpush.msra.mxu0 %v295
    %341 = vmatpush.msra.mxu0 %v294
    %342 = vmatpush.msra.mxu0 %v293
    %343 = vmatpush.msra.mxu0 %v292
    %344 = vmatpush.msra.mxu0 %v291
    %345 = vmatpush.msra.mxu0 %v290
    %346 = vmatpush.msra.mxu0 %v289
    %347 = vmatpush.msra.mxu0 %v288
    %348 = vmatpush.msra.mxu0 %v287
    %349 = vmatpush.msra.mxu0 %v286
    %350 = vmatmul.f32.gmra.mxu0 %v258
    %v351 = vpop.f32.mrf.mxu0
    %v352 = vadd.f32 0.0, %v351
    %353 = vmatmul.f32.gmra.mxu0 %v261
    %v354 = vpop.f32.mrf.mxu0
    %v355 = vadd.f32 0.0, %v354
    %356 = vdwg.mxu0
    %357 = vmatpush.msra.mxu0 %v317
    %358 = vmatpush.msra.mxu0 %v316
    %359 = vmatpush.msra.mxu0 %v315
    %360 = vmatpush.msra.mxu0 %v314
    %361 = vmatpush.msra.mxu0 %v313
    %362 = vmatpush.msra.mxu0 %v312
    %363 = vmatpush.msra.mxu0 %v311
    %364 = vmatpush.msra.mxu0 %v310
    %365 = vmatpush.msra.mxu0 %v309
    %366 = vmatpush.msra.mxu0 %v308
    %367 = vmatpush.msra.mxu0 %v307
    %368 = vmatpush.msra.mxu0 %v306
    %369 = vmatpush.msra.mxu0 %v305
    %370 = vmatpush.msra.mxu0 %v304
    %371 = vmatpush.msra.mxu0 %v303
    %372 = vmatpush.msra.mxu0 %v302
    %373 = vmatmul.f32.gmra.mxu0 %v238
    %v374 = vpop.f32.mrf.mxu0
    %v375 = vadd.f32 %v352, %v374
    %376 = vmatmul.f32.gmra.mxu0 %v239
    %v377 = vpop.f32.mrf.mxu0
    %v378 = vadd.f32 %v355, %v377
    %379 = vdwg.mxu0
    %380 = vmatpush.msra.mxu0 %v333
    %381 = vmatpush.msra.mxu0 %v332
    %382 = vmatpush.msra.mxu0 %v331
    %383 = vmatpush.msra.mxu0 %v330
    %384 = vmatpush.msra.mxu0 %v329
    %385 = vmatpush.msra.mxu0 %v328
    %386 = vmatpush.msra.mxu0 %v327
    %387 = vmatpush.msra.mxu0 %v326
    %388 = vmatpush.msra.mxu0 %v325
    %389 = vmatpush.msra.mxu0 %v324
    %390 = vmatpush.msra.mxu0 %v323
    %391 = vmatpush.msra.mxu0 %v322
    %392 = vmatpush.msra.mxu0 %v321
    %393 = vmatpush.msra.mxu0 %v320
    %394 = vmatpush.msra.mxu0 %v319
    %395 = vmatpush.msra.mxu0 %v318
    %396 = vmatmul.f32.gmra.mxu0 %v281
    %v397 = vpop.f32.mrf.mxu0
    %v398 = vadd.f32 %v375, %v397
    %399 = vmatmul.f32.gmra.mxu0 %v284
    %v400 = vpop.f32.mrf.mxu0
    %v401 = vadd.f32 %v378, %v400
    %402 = vdwg.mxu0
    %v403 = vld [vmem:[%s3 + $0x2] sm:$0x1]
    %v404 = vperm.slane %v403, 0
    %v405 = vmul.f32 %v398, %v404
    %v406 = vmul.f32 %v401, %v404
    %v407 = vld [vmem:[%s3 + $0x3] sm:$0x1]
    %v408 = vperm.slane %v407, 0
    %v409 = vadd.f32 %v405, %v408
    %v410 = vadd.f32 %v406, %v408
    %v411 = vadd.f32 %v409, %v33
    %v412 = vadd.f32 %v410, %v34
    %v413 = vmax.f32 %v411, 0.0
    %v414 = vmax.f32 %v412, 0.0
    %415 = vst [vmem:[%s4] sm:$0xff] %v413
    %416 = vst [vmem:[%s4 + $0x8] sm:$0xff] %v414
    // Predicated region
    $region22: #{basic_block_pallas.1} parent=1 // pred_check
      _
    $region23: #{basic_block_pallas.1} parent=1 // pred_check_branch
      %418 = sbr.rel (0) target = $region25
    $region24: #{basic_block_pallas.1} parent=1 // pred_region
      _
    $region25: #{basic_block_pallas.1} parent=1 // pred_fallthru
      _
    // Predicated region
    $region26: #{basic_block_pallas.1} parent=1 // pred_check
      _
    $region27: #{basic_block_pallas.1} parent=1 // pred_check_branch
      %420 = sbr.rel (0) target = $region29
    $region28: #{basic_block_pallas.1} parent=1 // pred_region
      _
    $region29: #{basic_block_pallas.1} parent=1 // pred_fallthru
      _
    %421 = vsyncpa [#allocation3], 1

</llo_original>
